<compile_context>
chip_gen: v7x
topology: tpu7x:2x2x1
jax: 0.10.0
libtpu: 0.0.40
codegen_flags: <defaults>
</compile_context>

<pallas_src>
import jax
import jax.numpy as jnp
from jax.experimental import pallas as pl
from jax.experimental.pallas import tpu as pltpu

HIDDEN = 100   # logical hidden width (matches the PyTorch module)
H_PAD = 128    # padded to one full lane-width / MXU tile


def mlp_kernel(x_ref, vecs_ref, w2_ref, b3_ref, o_ref):
    # x_ref: (1, bb) f32 -- batch on lanes.
    x = x_ref[...]

    vecs = vecs_ref[...]          # (128, 4) f32, resident
    w1 = vecs[:, 0:1]             # (128, 1)
    b1 = vecs[:, 1:2]
    b2 = vecs[:, 2:3]
    w3 = vecs[:, 3:4]

    # Layer 1: K=1 "matmul" on the VPU as a broadcast multiply.
    #   (H,1) * (1,bb) + (H,1) -> (H, bb)
    h1 = jnp.maximum(w1 * x + b1, 0.0)

    # Layer 2: one clean 128x128 bf16 MXU tile with f32 accumulation:
    #   h2^T = W2^T @ h1^T.  Padded rows/cols are zero, so math is unchanged.
    h2 = jnp.dot(w2_ref[...], h1.astype(jnp.bfloat16),
                 preferred_element_type=jnp.float32)                  # (H, bb)
    h2 = jnp.maximum(h2 + b2, 0.0)

    # Layer 3: N=1 matmul as multiply + sublane (cross-sublane) reduction.
    y = jnp.sum(h2 * w3, axis=0, keepdims=True)                       # (1, bb)

    o_ref[...] = (y + b3_ref[0, 0]).astype(o_ref.dtype)


def pack_params(params):
    """Logical (PyTorch-style) params -> padded, transposed kernel params."""
    w1, b1, w2, b2, w3, b3 = params
    ph = H_PAD - HIDDEN

    def col(v):
        return jnp.pad(v.reshape(HIDDEN, 1).astype(jnp.float32), ((0, ph), (0, 0)))

    vecs = jnp.concatenate(
        [col(w1.reshape(HIDDEN)), col(b1), col(b2), col(w3.reshape(HIDDEN))],
        axis=1)                                                        # (128, 4)
    w2k = jnp.pad(w2.T, ((0, ph), (0, ph))).astype(jnp.bfloat16)       # (128, 128)
    b3k = b3.reshape(1, 1).astype(jnp.float32)                         # (1, 1)
    return vecs, w2k, b3k


def mlp_forward(x, params, *, block_b=8192):
    """x: (B, 1) float32 -> (B, 1) float32."""
    B = x.shape[0]
    vecs, w2k, b3k = pack_params(params)

    # Batch tile: multiple of 128 lanes.  Large tiles amortize the ~0.35 us
    # per-grid-step cost; at bb=8192 f32 intermediates are ~14 MiB, well under
    # the raised VMEM limit on every generation (v5e/v6e/v7x).
    bb = min(block_b, ((B + 127) // 128) * 128)
    bb = max(bb, 128)
    b_pad = ((B + bb - 1) // bb) * bb
    xt = jnp.pad(x.reshape(1, B).astype(jnp.float32), ((0, 0), (0, b_pad - B)))

    def resident(shape):  # constant index map -> DMA'd once, stays in VMEM
        return pl.BlockSpec(shape, lambda i: (0, 0))

    cost = pl.CostEstimate(
        flops=int(b_pad) * (2 * H_PAD * H_PAD + 8 * H_PAD + 2),
        transcendentals=0,
        bytes_accessed=int(xt.size * 4 + b_pad * 4
                           + H_PAD * H_PAD * 2 + H_PAD * 4 * 4 + 4),
    )

    out = pl.pallas_call(
        mlp_kernel,
        out_shape=jax.ShapeDtypeStruct((1, b_pad), jnp.float32),
        grid=(b_pad // bb,),
        in_specs=[
            pl.BlockSpec((1, bb), lambda i: (0, i)),              # x tile (lane-dense)
            resident((H_PAD, 4)),                                 # [w1, b1, b2, w3]
            resident((H_PAD, H_PAD)),                             # W2^T (bf16)
            pl.BlockSpec(memory_space=pltpu.MemorySpace.SMEM),    # b3 scalar
        ],
        out_specs=pl.BlockSpec((1, bb), lambda i: (0, i)),        # lane-dense output
        compiler_params=pltpu.CompilerParams(
            dimension_semantics=("parallel",),      # shard batch tiles (v7x 2 TCs)
            vmem_limit_bytes=48 * 1024 * 1024,      # covers bb=8192 even on v5e
        ),
        cost_estimate=cost,
    )(xt, vecs, w2k, b3k)

    return out[0, :B].reshape(B, 1)


def init_params(key):
    # Deterministic init mimicking PyTorch Linear default:
    # U(-1/sqrt(fan_in), 1/sqrt(fan_in)); weights stored as (in, out).
    def linear(key, fan_in, fan_out):
        kw, kb = jax.random.split(key)
        bound = 1.0 / jnp.sqrt(jnp.asarray(fan_in, jnp.float32))
        w = jax.random.uniform(kw, (fan_in, fan_out), jnp.float32, -bound, bound)
        b = jax.random.uniform(kb, (fan_out,), jnp.float32, -bound, bound)
        return w, b

    k1, k2, k3 = jax.random.split(key, 3)
    w1, b1 = linear(k1, 1, HIDDEN)
    w2, b2 = linear(k2, HIDDEN, HIDDEN)
    w3, b3 = linear(k3, HIDDEN, 1)
    return (w1, b1, w2, b2, w3, b3)


def mlp_reference(x, params):
    w1, b1, w2, b2, w3, b3 = params
    h1 = jnp.maximum(x @ w1 + b1, 0.0)
    h2 = jnp.maximum(h1 @ w2 + b2, 0.0)
    return h2 @ w3 + b3


if __name__ == "__main__":
    key = jax.random.PRNGKey(0)
    kx, kp = jax.random.split(key)
    batch = 8
    x = jax.random.normal(kx, (batch, 1), jnp.float32)  # (B, 1) input
    params = init_params(kp)

    out = mlp_forward(x, params)
    out = jax.block_until_ready(out)

    ref = mlp_reference(x, params)
    assert out.shape == (batch, 1)
    # Layer-2 runs bf16 on the MXU (f32 accumulation), so compare with a
    # correspondingly relaxed tolerance vs. the pure-f32 reference.
    err = float(jnp.max(jnp.abs(out - ref)))
    assert jnp.allclose(out, ref, atol=5e-2, rtol=2e-2), err

    print("KERNEL_OK")
</pallas_src>

<mosaic_0001>
module attributes {stable_mosaic.version = 11 : i64} {
  func.func @mlp_kernel(%arg0: i32, %arg1: memref<1x128xf32, #tpu.memory_space<vmem>>, %arg2: memref<128x4xf32, #tpu.memory_space<vmem>>, %arg3: memref<128x128xbf16, #tpu.memory_space<vmem>>, %arg4: memref<1x1xf32, #tpu.memory_space<smem>>, %arg5: memref<1x128xf32, #tpu.memory_space<vmem>>) attributes {dimension_semantics = [#tpu.dimension_semantics<parallel>], iteration_bounds = array<i64: 1>, scalar_prefetch = 0 : i64, scratch_operands = 0 : i64, tpu.core_type = #tpu.core_type<tc>, window_params = [{transform_indices = @transform_0, window_bounds = array<i64: 1, 128>}, {pipeline_mode = #tpu.pipeline_mode<synchronous>, transform_indices = @transform_1, window_bounds = array<i64: 128, 4>}, {pipeline_mode = #tpu.pipeline_mode<synchronous>, transform_indices = @transform_2, window_bounds = array<i64: 128, 128>}, {transform_indices = @transform_3, window_bounds = array<i64: 1, 1>}, {transform_indices = @transform_4, window_bounds = array<i64: 1, 128>}]} {
    %c0 = arith.constant 0 : index
    %c0_0 = arith.constant 0 : index
    %0 = vector.load %arg1[%c0, %c0_0] : memref<1x128xf32, #tpu.memory_space<vmem>>, vector<1x128xf32>
    %c0_1 = arith.constant 0 : index
    %c0_2 = arith.constant 0 : index
    %1 = vector.load %arg2[%c0_1, %c0_2] : memref<128x4xf32, #tpu.memory_space<vmem>>, vector<128x4xf32>
    %2 = vector.extract_strided_slice %1 {offsets = [0, 0], sizes = [128, 1], strides = [1, 1]} : vector<128x4xf32> to vector<128x1xf32>
    %3 = vector.extract_strided_slice %1 {offsets = [0, 1], sizes = [128, 1], strides = [1, 1]} : vector<128x4xf32> to vector<128x1xf32>
    %4 = vector.extract_strided_slice %1 {offsets = [0, 2], sizes = [128, 1], strides = [1, 1]} : vector<128x4xf32> to vector<128x1xf32>
    %5 = vector.extract_strided_slice %1 {offsets = [0, 3], sizes = [128, 1], strides = [1, 1]} : vector<128x4xf32> to vector<128x1xf32>
    %6 = vector.broadcast %2 : vector<128x1xf32> to vector<128x128xf32>
    %7 = vector.broadcast %0 : vector<1x128xf32> to vector<128x128xf32>
    %8 = arith.mulf %6, %7 : vector<128x128xf32>
    %9 = vector.broadcast %3 : vector<128x1xf32> to vector<128x128xf32>
    %10 = arith.addf %8, %9 : vector<128x128xf32>
    %cst = arith.constant 0.000000e+00 : f32
    %11 = vector.broadcast %cst : f32 to vector<128x128xf32>
    %12 = arith.maximumf %10, %11 : vector<128x128xf32>
    %c0_3 = arith.constant 0 : index
    %c0_4 = arith.constant 0 : index
    %13 = vector.load %arg3[%c0_3, %c0_4] : memref<128x128xbf16, #tpu.memory_space<vmem>>, vector<128x128xbf16>
    %14 = arith.truncf %12 : vector<128x128xf32> to vector<128x128xbf16>
    %cst_5 = arith.constant dense<0.000000e+00> : vector<128x128xf32>
    %15 = tpu.matmul %13, %14, %cst_5 {dimension_numbers = #tpu.dot_dimension_numbers<[1], [0], [0], [1], [0, 0, 1, 1], [], []>} : vector<128x128xbf16>, vector<128x128xbf16>, vector<128x128xf32> -> vector<128x128xf32>
    %16 = vector.broadcast %4 : vector<128x1xf32> to vector<128x128xf32>
    %17 = arith.addf %15, %16 : vector<128x128xf32>
    %cst_6 = arith.constant 0.000000e+00 : f32
    %18 = vector.broadcast %cst_6 : f32 to vector<128x128xf32>
    %19 = arith.maximumf %17, %18 : vector<128x128xf32>
    %20 = vector.broadcast %5 : vector<128x1xf32> to vector<128x128xf32>
    %21 = arith.mulf %19, %20 : vector<128x128xf32>
    %cst_7 = arith.constant dense<0.000000e+00> : vector<128xf32>
    %22 = vector.multi_reduction <add>, %21, %cst_7 [0] : vector<128x128xf32> to vector<128xf32>
    %23 = vector.shape_cast %22 : vector<128xf32> to vector<1x128xf32>
    %c0_8 = arith.constant 0 : index
    %c0_9 = arith.constant 0 : index
    %24 = memref.load %arg4[%c0_8, %c0_9] : memref<1x1xf32, #tpu.memory_space<smem>>
    %25 = vector.broadcast %24 : f32 to vector<1x128xf32>
    %26 = arith.addf %23, %25 : vector<1x128xf32>
    %c0_10 = arith.constant 0 : index
    %c0_11 = arith.constant 0 : index
    %27 = vector.load %arg5[%c0_10, %c0_11] : memref<1x128xf32, #tpu.memory_space<vmem>>, vector<1x128xf32>
    tpu.vector_store %arg5[%c0_10, %c0_11], %26 {strides = array<i32>} : memref<1x128xf32, #tpu.memory_space<vmem>>, vector<1x128xf32>,
    return
  }
  func.func @transform_0(%arg0: i32) -> (i32, i32) {
    %c0_i32 = arith.constant 0 : i32
    %c0_i32_0 = arith.constant 0 : i32
    return %c0_i32, %arg0 : i32, i32
  }
  func.func @transform_1(%arg0: i32) -> (i32, i32) {
    %c0_i32 = arith.constant 0 : i32
    %c0_i32_0 = arith.constant 0 : i32
    %c0_i32_1 = arith.constant 0 : i32
    return %c0_i32, %c0_i32_0 : i32, i32
  }
  func.func @transform_2(%arg0: i32) -> (i32, i32) {
    %c0_i32 = arith.constant 0 : i32
    %c0_i32_0 = arith.constant 0 : i32
    %c0_i32_1 = arith.constant 0 : i32
    return %c0_i32, %c0_i32_0 : i32, i32
  }
  func.func @transform_3(%arg0: i32) -> (i32, i32) {
    %c0_i32 = arith.constant 0 : i32
    %c0_i32_0 = arith.constant 0 : i32
    %c0_i32_1 = arith.constant 0 : i32
    return %c0_i32, %c0_i32_0 : i32, i32
  }
  func.func @transform_4(%arg0: i32) -> (i32, i32) {
    %c0_i32 = arith.constant 0 : i32
    %c0_i32_0 = arith.constant 0 : i32
    return %c0_i32, %arg0 : i32, i32
  }
}

</mosaic_0001>

<llo_original>
// kernel: tpu_custom_call.1
$region0: #{tpu_custom_call.1}
  #allocation0 [shape = 'u32[]', space=smem, size = 0x4, offset = 0x4, fixed_abs, tag = 'smem constant byte address 0x4 - core index']
  #allocation1 [shape = 'u32[144,128]{1,0:T(1,128)}', space=vmem, size = 0x12000, scoped, tag = 'internal scratch']
  #allocation2 [shape = 'f32[1,1]{1,0:T(1,128)S(6)}', space=smem, size = 0x200, scoped, tag = 'scoped memory for tpu_custom_call.1']
  %s0 = inlined_call_operand.vmem [shape: f32[1,128], index: 0, kind: input, shape index: {}]
  %s1 = inlined_call_operand.vmem [shape: f32[128,4], index: 1, kind: input, shape index: {}]
  %s2 = inlined_call_operand.vmem [shape: bf16[128,128], index: 2, kind: input, shape index: {}]
  %s3 = inlined_call_operand.<no memory space> [shape: f32[1,1], index: 3, kind: input, shape index: {}]
  %s4 = inlined_call_operand.hbm [shape: f32[1,128], index: 4, kind: output, shape index: {}]
  %s5 = sld [smem:[#allocation0]]
  $region26: #{tpu_custom_call.1} parent=0
    _
  %s7 = ssub.s32 1, %s5
  %s8 = scalar_select 0, %s7, %s5
  %9 = sst [smem:[#allocation2]] %s3
  $region1: #{tpu_custom_call.1} parent=0
    #allocation3 [shape = 'u8[512]{0}', space=vmem, size = 0x400, scoped, tag = 'output window, operand 0, single buffered']
    #allocation4 [shape = 's32[1]{0}', space=sflag, size = 0x4, scoped, tag = 'scoped memory for tpu_custom_call.1']
    %10 = vsyncpa [#allocation4], 0
    // Predicated region
    $region2: #{tpu_custom_call.1} parent=1 // pred_check
      _
    $region3: #{tpu_custom_call.1} parent=1 // pred_check_branch
      %12 = sbr.rel (0) target = $region5
    $region4: #{tpu_custom_call.1} parent=1 // pred_region
      _
    $region5: #{tpu_custom_call.1} parent=1 // pred_fallthru
      _
    // Predicated region
    $region6: #{tpu_custom_call.1} parent=1 // pred_check
      _
    $region7: #{tpu_custom_call.1} parent=1 // pred_check_branch
      %14 = sbr.rel (0) target = $region9
    $region8: #{tpu_custom_call.1} parent=1 // pred_region
      _
    $region9: #{tpu_custom_call.1} parent=1 // pred_fallthru
      _
    // Predicated region
    $region10: #{tpu_custom_call.1} parent=1 // pred_check
      _
    $region11: #{tpu_custom_call.1} parent=1 // pred_check_branch
      %16 = sbr.rel (0) target = $region13
    $region12: #{tpu_custom_call.1} parent=1 // pred_region
      _
    $region13: #{tpu_custom_call.1} parent=1 // pred_fallthru
      _
    // Predicated region
    $region14: #{tpu_custom_call.1} parent=1 // pred_check
      _
    $region15: #{tpu_custom_call.1} parent=1 // pred_check_branch
      %18 = sbr.rel (0) target = $region17
    $region16: #{tpu_custom_call.1} parent=1 // pred_region
      _
    $region17: #{tpu_custom_call.1} parent=1 // pred_fallthru
      _
    %v20 = vld [vmem:[%s0] sm:$0x1]
    %v21 = vld [vmem:[%s1] sm:$0xff]
    %v22 = vld [vmem:[%s1 + $0x8] sm:$0xff]
    %v23 = vld [vmem:[%s1 + $0x10] sm:$0xff]
    %v24 = vld [vmem:[%s1 + $0x18] sm:$0xff]
    %v25 = vld [vmem:[%s1 + $0x20] sm:$0xff]
    %v26 = vld [vmem:[%s1 + $0x28] sm:$0xff]
    %v27 = vld [vmem:[%s1 + $0x30] sm:$0xff]
    %v28 = vld [vmem:[%s1 + $0x38] sm:$0xff]
    %v29 = vld [vmem:[%s1 + $0x40] sm:$0xff]
    %v30 = vld [vmem:[%s1 + $0x48] sm:$0xff]
    %v31 = vld [vmem:[%s1 + $0x50] sm:$0xff]
    %v32 = vld [vmem:[%s1 + $0x58] sm:$0xff]
    %v33 = vld [vmem:[%s1 + $0x60] sm:$0xff]
    %v34 = vld [vmem:[%s1 + $0x68] sm:$0xff]
    %v35 = vld [vmem:[%s1 + $0x70] sm:$0xff]
    %v36 = vld [vmem:[%s1 + $0x78] sm:$0xff]
    %38 = vset.pattern.permute.xlu0 0
    %39 = vperm.xlu0 %38, %v21
    %v40 = vpop.permute.xlu0 %39
    %43 = vset.pattern.permute.xlu0 0
    %44 = vperm.xlu0 %43, %v22
    %v45 = vpop.permute.xlu0 %44
    %48 = vset.pattern.permute.xlu0 0
    %49 = vperm.xlu0 %48, %v23
    %v50 = vpop.permute.xlu0 %49
    %53 = vset.pattern.permute.xlu0 0
    %54 = vperm.xlu0 %53, %v24
    %v55 = vpop.permute.xlu0 %54
    %58 = vset.pattern.permute.xlu0 0
    %59 = vperm.xlu0 %58, %v25
    %v60 = vpop.permute.xlu0 %59
    %63 = vset.pattern.permute.xlu0 0
    %64 = vperm.xlu0 %63, %v26
    %v65 = vpop.permute.xlu0 %64
    %68 = vset.pattern.permute.xlu0 0
    %69 = vperm.xlu0 %68, %v27
    %v70 = vpop.permute.xlu0 %69
    %73 = vset.pattern.permute.xlu0 0
    %74 = vperm.xlu0 %73, %v28
    %v75 = vpop.permute.xlu0 %74
    %78 = vset.pattern.permute.xlu0 0
    %79 = vperm.xlu0 %78, %v29
    %v80 = vpop.permute.xlu0 %79
    %83 = vset.pattern.permute.xlu0 0
    %84 = vperm.xlu0 %83, %v30
    %v85 = vpop.permute.xlu0 %84
    %88 = vset.pattern.permute.xlu0 0
    %89 = vperm.xlu0 %88, %v31
    %v90 = vpop.permute.xlu0 %89
    %93 = vset.pattern.permute.xlu0 0
    %94 = vperm.xlu0 %93, %v32
    %v95 = vpop.permute.xlu0 %94
    %98 = vset.pattern.permute.xlu0 0
    %99 = vperm.xlu0 %98, %v33
    %v100 = vpop.permute.xlu0 %99
    %103 = vset.pattern.permute.xlu0 0
    %104 = vperm.xlu0 %103, %v34
    %v105 = vpop.permute.xlu0 %104
    %108 = vset.pattern.permute.xlu0 0
    %109 = vperm.xlu0 %108, %v35
    %v110 = vpop.permute.xlu0 %109
    %113 = vset.pattern.permute.xlu0 0
    %114 = vperm.xlu0 %113, %v36
    %v115 = vpop.permute.xlu0 %114
    %v118 = vlaneseq
    %v119 = vshrl.u32 %v118, 7
    %v120 = vsub.s32 0, %v119
    %v121 = vrot.slane %v20, %v120
    %v123 = vmul.f32 %v40, %v121
    %v124 = vmul.f32 %v45, %v121
    %v125 = vmul.f32 %v50, %v121
    %v126 = vmul.f32 %v55, %v121
    %v127 = vmul.f32 %v60, %v121
    %v128 = vmul.f32 %v65, %v121
    %v129 = vmul.f32 %v70, %v121
    %v130 = vmul.f32 %v75, %v121
    %v131 = vmul.f32 %v80, %v121
    %v132 = vmul.f32 %v85, %v121
    %v133 = vmul.f32 %v90, %v121
    %v134 = vmul.f32 %v95, %v121
    %v135 = vmul.f32 %v100, %v121
    %v136 = vmul.f32 %v105, %v121
    %v137 = vmul.f32 %v110, %v121
    %v138 = vmul.f32 %v115, %v121
    %139 = vset.pattern.permute.xlu0 1
    %140 = vperm.xlu0 %139, %v21
    %v141 = vpop.permute.xlu0 %140
    %143 = vset.pattern.permute.xlu0 1
    %144 = vperm.xlu0 %143, %v22
    %v145 = vpop.permute.xlu0 %144
    %147 = vset.pattern.permute.xlu0 1
    %148 = vperm.xlu0 %147, %v23
    %v149 = vpop.permute.xlu0 %148
    %151 = vset.pattern.permute.xlu0 1
    %152 = vperm.xlu0 %151, %v24
    %v153 = vpop.permute.xlu0 %152
    %155 = vset.pattern.permute.xlu0 1
    %156 = vperm.xlu0 %155, %v25
    %v157 = vpop.permute.xlu0 %156
    %159 = vset.pattern.permute.xlu0 1
    %160 = vperm.xlu0 %159, %v26
    %v161 = vpop.permute.xlu0 %160
    %163 = vset.pattern.permute.xlu0 1
    %164 = vperm.xlu0 %163, %v27
    %v165 = vpop.permute.xlu0 %164
    %167 = vset.pattern.permute.xlu0 1
    %168 = vperm.xlu0 %167, %v28
    %v169 = vpop.permute.xlu0 %168
    %171 = vset.pattern.permute.xlu0 1
    %172 = vperm.xlu0 %171, %v29
    %v173 = vpop.permute.xlu0 %172
    %175 = vset.pattern.permute.xlu0 1
    %176 = vperm.xlu0 %175, %v30
    %v177 = vpop.permute.xlu0 %176
    %179 = vset.pattern.permute.xlu0 1
    %180 = vperm.xlu0 %179, %v31
    %v181 = vpop.permute.xlu0 %180
    %183 = vset.pattern.permute.xlu0 1
    %184 = vperm.xlu0 %183, %v32
    %v185 = vpop.permute.xlu0 %184
    %187 = vset.pattern.permute.xlu0 1
    %188 = vperm.xlu0 %187, %v33
    %v189 = vpop.permute.xlu0 %188
    %191 = vset.pattern.permute.xlu0 1
    %192 = vperm.xlu0 %191, %v34
    %v193 = vpop.permute.xlu0 %192
    %195 = vset.pattern.permute.xlu0 1
    %196 = vperm.xlu0 %195, %v35
    %v197 = vpop.permute.xlu0 %196
    %199 = vset.pattern.permute.xlu0 1
    %200 = vperm.xlu0 %199, %v36
    %v201 = vpop.permute.xlu0 %200
    %v203 = vadd.f32 %v123, %v141
    %v204 = vadd.f32 %v124, %v145
    %v205 = vadd.f32 %v125, %v149
    %v206 = vadd.f32 %v126, %v153
    %v207 = vadd.f32 %v127, %v157
    %v208 = vadd.f32 %v128, %v161
    %v209 = vadd.f32 %v129, %v165
    %v210 = vadd.f32 %v130, %v169
    %v211 = vadd.f32 %v131, %v173
    %v212 = vadd.f32 %v132, %v177
    %v213 = vadd.f32 %v133, %v181
    %v214 = vadd.f32 %v134, %v185
    %v215 = vadd.f32 %v135, %v189
    %v216 = vadd.f32 %v136, %v193
    %v217 = vadd.f32 %v137, %v197
    %v218 = vadd.f32 %v138, %v201
    %v219 = vmax.f32 %v203, 0.0
    %v220 = vmax.f32 %v204, 0.0
    %v221 = vmax.f32 %v205, 0.0
    %v222 = vmax.f32 %v206, 0.0
    %v223 = vmax.f32 %v207, 0.0
    %v224 = vmax.f32 %v208, 0.0
    %v225 = vmax.f32 %v209, 0.0
    %v226 = vmax.f32 %v210, 0.0
    %v227 = vmax.f32 %v211, 0.0
    %v228 = vmax.f32 %v212, 0.0
    %v229 = vmax.f32 %v213, 0.0
    %v230 = vmax.f32 %v214, 0.0
    %v231 = vmax.f32 %v215, 0.0
    %v232 = vmax.f32 %v216, 0.0
    %v233 = vmax.f32 %v217, 0.0
    %v234 = vmax.f32 %v218, 0.0
    %v235 = vld [vmem:[%s2] sm:$0xf]
    %v236 = vld [vmem:[%s2 + $0x4] sm:$0xf]
    %v237 = vld [vmem:[%s2 + $0x8] sm:$0xf]
    %v238 = vld [vmem:[%s2 + $0xc] sm:$0xf]
    %v239 = vld [vmem:[%s2 + $0x10] sm:$0xf]
    %v240 = vld [vmem:[%s2 + $0x14] sm:$0xf]
    %v241 = vld [vmem:[%s2 + $0x18] sm:$0xf]
    %v242 = vld [vmem:[%s2 + $0x1c] sm:$0xf]
    %v243 = vld [vmem:[%s2 + $0x20] sm:$0xf]
    %v244 = vld [vmem:[%s2 + $0x24] sm:$0xf]
    %v245 = vld [vmem:[%s2 + $0x28] sm:$0xf]
    %v246 = vld [vmem:[%s2 + $0x2c] sm:$0xf]
    %v247 = vld [vmem:[%s2 + $0x30] sm:$0xf]
    %v248 = vld [vmem:[%s2 + $0x34] sm:$0xf]
    %v249 = vld [vmem:[%s2 + $0x38] sm:$0xf]
    %v250 = vld [vmem:[%s2 + $0x3c] sm:$0xf]
    %v251 = vpack.c.bf16 %v220, %v219
    %v252 = vpack.c.bf16 %v222, %v221
    %v253 = vpack.c.bf16 %v224, %v223
    %v254 = vpack.c.bf16 %v226, %v225
    %v255 = vpack.c.bf16 %v228, %v227
    %v256 = vpack.c.bf16 %v230, %v229
    %v257 = vpack.c.bf16 %v232, %v231
    %v258 = vpack.c.bf16 %v234, %v233
    %259 = vset.pattern.permute.xlu0 2
    %260 = vperm.xlu0 %259, %v21
    %v261 = vpop.permute.xlu0 %260
    %263 = vset.pattern.permute.xlu0 2
    %264 = vperm.xlu0 %263, %v22
    %v265 = vpop.permute.xlu0 %264
    %267 = vset.pattern.permute.xlu0 2
    %268 = vperm.xlu0 %267, %v23
    %v269 = vpop.permute.xlu0 %268
    %271 = vset.pattern.permute.xlu0 2
    %272 = vperm.xlu0 %271, %v24
    %v273 = vpop.permute.xlu0 %272
    %275 = vset.pattern.permute.xlu0 2
    %276 = vperm.xlu0 %275, %v25
    %v277 = vpop.permute.xlu0 %276
    %279 = vset.pattern.permute.xlu0 2
    %280 = vperm.xlu0 %279, %v26
    %v281 = vpop.permute.xlu0 %280
    %283 = vset.pattern.permute.xlu0 2
    %284 = vperm.xlu0 %283, %v27
    %v285 = vpop.permute.xlu0 %284
    %287 = vset.pattern.permute.xlu0 2
    %288 = vperm.xlu0 %287, %v28
    %v289 = vpop.permute.xlu0 %288
    %291 = vset.pattern.permute.xlu0 2
    %292 = vperm.xlu0 %291, %v29
    %v293 = vpop.permute.xlu0 %292
    %295 = vset.pattern.permute.xlu0 2
    %296 = vperm.xlu0 %295, %v30
    %v297 = vpop.permute.xlu0 %296
    %299 = vset.pattern.permute.xlu0 2
    %300 = vperm.xlu0 %299, %v31
    %v301 = vpop.permute.xlu0 %300
    %303 = vset.pattern.permute.xlu0 2
    %304 = vperm.xlu0 %303, %v32
    %v305 = vpop.permute.xlu0 %304
    %307 = vset.pattern.permute.xlu0 2
    %308 = vperm.xlu0 %307, %v33
    %v309 = vpop.permute.xlu0 %308
    %311 = vset.pattern.permute.xlu0 2
    %312 = vperm.xlu0 %311, %v34
    %v313 = vpop.permute.xlu0 %312
    %315 = vset.pattern.permute.xlu0 2
    %316 = vperm.xlu0 %315, %v35
    %v317 = vpop.permute.xlu0 %316
    %319 = vset.pattern.permute.xlu0 2
    %320 = vperm.xlu0 %319, %v36
    %v321 = vpop.permute.xlu0 %320
    %v339 = vunpack.c.l.b16 %v235
    %v340 = vunpack.c.l.b16 %v236
    %v341 = vunpack.c.l.b16 %v237
    %v342 = vunpack.c.l.b16 %v238
    %v343 = vunpack.c.l.b16 %v239
    %v344 = vunpack.c.l.b16 %v240
    %v345 = vunpack.c.l.b16 %v241
    %v346 = vunpack.c.l.b16 %v242
    %v347 = vunpack.c.l.b16 %v243
    %v348 = vunpack.c.l.b16 %v244
    %v349 = vunpack.c.l.b16 %v245
    %v350 = vunpack.c.l.b16 %v246
    %v351 = vunpack.c.l.b16 %v247
    %v352 = vunpack.c.l.b16 %v248
    %v353 = vunpack.c.l.b16 %v249
    %v354 = vunpack.c.l.b16 %v250
    %v355 = vpack.c.b16 %v340, %v339
    %v356 = vpack.c.b16 %v342, %v341
    %v357 = vpack.c.b16 %v344, %v343
    %v358 = vpack.c.b16 %v346, %v345
    %v359 = vpack.c.b16 %v348, %v347
    %v360 = vpack.c.b16 %v350, %v349
    %v361 = vpack.c.b16 %v352, %v351
    %v362 = vpack.c.b16 %v354, %v353
    %371 = vmatprep.subr.bf16.mxu0 0
    %372 = vmatpush1.bf16.msra.mxu0 %v251
    %373 = vmatprep.subr.bf16.mxu0 0
    %374 = vmatpush1.bf16.msra.mxu0 %v252
    %375 = vmatprep.subr.bf16.mxu0 0
    %376 = vmatpush1.bf16.msra.mxu0 %v253
    %377 = vmatprep.subr.bf16.mxu0 0
    %378 = vmatpush1.bf16.msra.mxu0 %v254
    %379 = vmatprep.subr.bf16.mxu0 0
    %380 = vmatpush1.bf16.msra.mxu0 %v255
    %381 = vmatprep.subr.bf16.mxu0 0
    %382 = vmatpush1.bf16.msra.mxu0 %v256
    %383 = vmatprep.subr.bf16.mxu0 0
    %384 = vmatpush1.bf16.msra.mxu0 %v257
    %385 = vmatprep.subr.bf16.mxu0 0
    %386 = vmatpush1.bf16.msra.mxu0 %v258
    %387 = vmatprep.subr.bf16.mxu0 0
    %388 = vmatpush1.bf16.msra.mxu0 0
    %389 = vmatprep.subr.bf16.mxu0 0
    %390 = vmatpush1.bf16.msra.mxu0 0
    %391 = vmatprep.subr.bf16.mxu0 0
    %392 = vmatpush1.bf16.msra.mxu0 0
    %393 = vmatprep.subr.bf16.mxu0 0
    %394 = vmatpush1.bf16.msra.mxu0 0
    %395 = vmatprep.subr.bf16.mxu0 0
    %396 = vmatpush1.bf16.msra.mxu0 0
    %397 = vmatprep.subr.bf16.mxu0 0
    %398 = vmatpush1.bf16.msra.mxu0 0
    %399 = vmatprep.subr.bf16.mxu0 0
    %400 = vmatpush1.bf16.msra.mxu0 0
    %401 = vmatprep.subr.bf16.mxu0 0
    %402 = vmatpush1.bf16.msra.mxu0 0
    %403 = vmatprep.mubr.bf16.mxu0 0
    %404 = vmatmul.mubr.bf16.gmra.mrb[0].mxu0 %v355
    %v405 = vpop.f32.mrb[0].mxu0
    %v406 = vadd.f32 %v261, %v405
    %v407 = vpop.f32.mrb[0].mxu0
    %v408 = vpop.f32.mrb[0].mxu0
    %v409 = vadd.f32 %v265, %v408
    %v410 = vpop.f32.mrb[0].mxu0
    %411 = vmatprep.mubr.bf16.mxu0 0
    %412 = vmatmul.mubr.bf16.gmra.mrb[0].mxu0 %v356
    %v413 = vpop.f32.mrb[0].mxu0
    %v414 = vadd.f32 %v269, %v413
    %v415 = vpop.f32.mrb[0].mxu0
    %v416 = vpop.f32.mrb[0].mxu0
    %v417 = vadd.f32 %v273, %v416
    %v418 = vpop.f32.mrb[0].mxu0
    %419 = vmatprep.mubr.bf16.mxu0 0
    %420 = vmatmul.mubr.bf16.gmra.mrb[0].mxu0 %v357
    %v421 = vpop.f32.mrb[0].mxu0
    %v422 = vadd.f32 %v277, %v421
    %v423 = vpop.f32.mrb[0].mxu0
    %v424 = vpop.f32.mrb[0].mxu0
    %v425 = vadd.f32 %v281, %v424
    %v426 = vpop.f32.mrb[0].mxu0
    %427 = vmatprep.mubr.bf16.mxu0 0
    %428 = vmatmul.mubr.bf16.gmra.mrb[0].mxu0 %v358
    %v429 = vpop.f32.mrb[0].mxu0
    %v430 = vadd.f32 %v285, %v429
    %v431 = vpop.f32.mrb[0].mxu0
    %v432 = vpop.f32.mrb[0].mxu0
    %v433 = vadd.f32 %v289, %v432
    %v434 = vpop.f32.mrb[0].mxu0
    %435 = vmatprep.mubr.bf16.mxu0 0
    %436 = vmatmul.mubr.bf16.gmra.mrb[0].mxu0 %v359
    %v437 = vpop.f32.mrb[0].mxu0
    %v438 = vadd.f32 %v293, %v437
    %v439 = vpop.f32.mrb[0].mxu0
    %v440 = vpop.f32.mrb[0].mxu0
    %v441 = vadd.f32 %v297, %v440
    %v442 = vpop.f32.mrb[0].mxu0
    %443 = vmatprep.mubr.bf16.mxu0 0
    %444 = vmatmul.mubr.bf16.gmra.mrb[0].mxu0 %v360
    %v445 = vpop.f32.mrb[0].mxu0
    %v446 = vadd.f32 %v301, %v445
    %v447 = vpop.f32.mrb[0].mxu0
    %v448 = vpop.f32.mrb[0].mxu0
    %v449 = vadd.f32 %v305, %v448
    %v450 = vpop.f32.mrb[0].mxu0
    %451 = vmatprep.mubr.bf16.mxu0 0
    %452 = vmatmul.mubr.bf16.gmra.mrb[0].mxu0 %v361
    %v453 = vpop.f32.mrb[0].mxu0
    %v454 = vadd.f32 %v309, %v453
    %v455 = vpop.f32.mrb[0].mxu0
    %v456 = vpop.f32.mrb[0].mxu0
    %v457 = vadd.f32 %v313, %v456
    %v458 = vpop.f32.mrb[0].mxu0
    %459 = vmatprep.mubr.bf16.mxu0 0
    %460 = vmatmul.mubr.bf16.gmra.mrb[0].mxu0 %v362
    %v461 = vpop.f32.mrb[0].mxu0
    %v462 = vadd.f32 %v317, %v461
    %v463 = vpop.f32.mrb[0].mxu0
    %v464 = vpop.f32.mrb[0].mxu0
    %v465 = vadd.f32 %v321, %v464
    %v466 = vpop.f32.mrb[0].mxu0
    %467 = vdwg.mxu0
    %v468 = vmax.f32 %v406, 0.0
    %v469 = vmax.f32 %v409, 0.0
    %v470 = vmax.f32 %v414, 0.0
    %v471 = vmax.f32 %v417, 0.0
    %v472 = vmax.f32 %v422, 0.0
    %v473 = vmax.f32 %v425, 0.0
    %v474 = vmax.f32 %v430, 0.0
    %v475 = vmax.f32 %v433, 0.0
    %v476 = vmax.f32 %v438, 0.0
    %v477 = vmax.f32 %v441, 0.0
    %v478 = vmax.f32 %v446, 0.0
    %v479 = vmax.f32 %v449, 0.0
    %v480 = vmax.f32 %v454, 0.0
    %v481 = vmax.f32 %v457, 0.0
    %v482 = vmax.f32 %v462, 0.0
    %v483 = vmax.f32 %v465, 0.0
    %484 = vset.pattern.permute.xlu0 3
    %485 = vperm.xlu0 %484, %v21
    %v486 = vpop.permute.xlu0 %485
    %488 = vset.pattern.permute.xlu0 3
    %489 = vperm.xlu0 %488, %v22
    %v490 = vpop.permute.xlu0 %489
    %492 = vset.pattern.permute.xlu0 3
    %493 = vperm.xlu0 %492, %v23
    %v494 = vpop.permute.xlu0 %493
    %496 = vset.pattern.permute.xlu0 3
    %497 = vperm.xlu0 %496, %v24
    %v498 = vpop.permute.xlu0 %497
    %500 = vset.pattern.permute.xlu0 3
    %501 = vperm.xlu0 %500, %v25
    %v502 = vpop.permute.xlu0 %501
    %504 = vset.pattern.permute.xlu0 3
    %505 = vperm.xlu0 %504, %v26
    %v506 = vpop.permute.xlu0 %505
    %508 = vset.pattern.permute.xlu0 3
    %509 = vperm.xlu0 %508, %v27
    %v510 = vpop.permute.xlu0 %509
    %512 = vset.pattern.permute.xlu0 3
    %513 = vperm.xlu0 %512, %v28
    %v514 = vpop.permute.xlu0 %513
    %516 = vset.pattern.permute.xlu0 3
    %517 = vperm.xlu0 %516, %v29
    %v518 = vpop.permute.xlu0 %517
    %520 = vset.pattern.permute.xlu0 3
    %521 = vperm.xlu0 %520, %v30
    %v522 = vpop.permute.xlu0 %521
    %524 = vset.pattern.permute.xlu0 3
    %525 = vperm.xlu0 %524, %v31
    %v526 = vpop.permute.xlu0 %525
    %528 = vset.pattern.permute.xlu0 3
    %529 = vperm.xlu0 %528, %v32
    %v530 = vpop.permute.xlu0 %529
    %532 = vset.pattern.permute.xlu0 3
    %533 = vperm.xlu0 %532, %v33
    %v534 = vpop.permute.xlu0 %533
    %536 = vset.pattern.permute.xlu0 3
    %537 = vperm.xlu0 %536, %v34
    %v538 = vpop.permute.xlu0 %537
    %540 = vset.pattern.permute.xlu0 3
    %541 = vperm.xlu0 %540, %v35
    %v542 = vpop.permute.xlu0 %541
    %544 = vset.pattern.permute.xlu0 3
    %545 = vperm.xlu0 %544, %v36
    %v546 = vpop.permute.xlu0 %545
    %v548 = vmul.f32 %v468, %v486
    %v549 = vmul.f32 %v469, %v490
    %v550 = vmul.f32 %v470, %v494
    %v551 = vmul.f32 %v471, %v498
    %v552 = vmul.f32 %v472, %v502
    %v553 = vmul.f32 %v473, %v506
    %v554 = vmul.f32 %v474, %v510
    %v555 = vmul.f32 %v475, %v514
    %v556 = vmul.f32 %v476, %v518
    %v557 = vmul.f32 %v477, %v522
    %v558 = vmul.f32 %v478, %v526
    %v559 = vmul.f32 %v479, %v530
    %v560 = vmul.f32 %v480, %v534
    %v561 = vmul.f32 %v481, %v538
    %v562 = vmul.f32 %v482, %v542
    %v563 = vmul.f32 %v483, %v546
    %v564 = vadd.f32 %v548, %v549
    %v565 = vadd.f32 %v564, %v550
    %v566 = vadd.f32 %v565, %v551
    %v567 = vadd.f32 %v566, %v552
    %v568 = vadd.f32 %v567, %v553
    %v569 = vadd.f32 %v568, %v554
    %v570 = vadd.f32 %v569, %v555
    %v571 = vadd.f32 %v570, %v556
    %v572 = vadd.f32 %v571, %v557
    %v573 = vadd.f32 %v572, %v558
    %v574 = vadd.f32 %v573, %v559
    %v575 = vadd.f32 %v574, %v560
    %v576 = vadd.f32 %v575, %v561
    %v577 = vadd.f32 %v576, %v562
    %v578 = vadd.f32 %v577, %v563
    %v579 = vrot.slane %v578, 4
    %v580 = vadd.f32 %v578, %v579
    %v581 = vrot.slane %v580, 2
    %v582 = vadd.f32 %v580, %v581
    %v583 = vrot.slane %v582, 1
    %v584 = vadd.f32 %v582, %v583
    %s585 = sld [smem:[#allocation2]]
    %v586 = vstv %s585
    %v587 = vadd.f32 %v584, %v586
    %588 = vst [vmem:[#allocation3] sm:$0x1] %v587
    // Predicated region
    $region18: #{tpu_custom_call.1} parent=1 // pred_check
      _
    $region19: #{tpu_custom_call.1} parent=1 // pred_check_branch
      %590 = sbr.rel (0) target = $region21
    $region20: #{tpu_custom_call.1} parent=1 // pred_region
      %s592 = ssub.s32 16, 16
      %593 = vsyncadd [#allocation4], %s592
      %s595 = sshll.u32 [#allocation3], 4
      %s596 = int_to_ptr.vmem [resolvable:$true] %s595
      %598 = dma.vmem_to_hbm [thread:$0]  %s596, 16, %s4, [#allocation4]
    $region21: #{tpu_custom_call.1} parent=1 // pred_fallthru
      _
    // Predicated region
    $region22: #{tpu_custom_call.1} parent=1 // pred_check
      _
    $region23: #{tpu_custom_call.1} parent=1 // pred_check_branch
      %600 = sbr.rel (0) target = $region25
    $region24: #{tpu_custom_call.1} parent=1 // pred_region
      %601 = dma.done [#allocation4], 16
    $region25: #{tpu_custom_call.1} parent=1 // pred_fallthru
      _
    %602 = vsyncpa [#allocation4], 1

</llo_original>
